<compile_context>
chip_gen: v7x
topology: tpu7x:2x2x1
jax: 0.10.0
libtpu: 0.0.40
codegen_flags: <defaults>
</compile_context>

<pallas_src>
import jax
import jax.numpy as jnp
from jax import lax
from jax.experimental import pallas as pl
from jax.experimental.pallas import tpu as pltpu


EPS = 1e-8  # torch.nn.functional.cosine_similarity default eps


def _similarity_kernel(x_ref, w_ref, b_ref, out_ref, acc_ref):
    # x_ref:  (2B, tk)      stacked [x1; x2] tile of the flattened inputs
    # w_ref:  (HIDDEN, tk)  weight tile in native (HIDDEN, D) layout
    # b_ref:  (1, HIDDEN)
    # out_ref:(B, 1)        cosine similarity per row
    # acc_ref:(2B, HIDDEN)  f32 accumulator, persistent across the K grid axis
    k = pl.program_id(0)

    @pl.when(k == 0)
    def _init():
        acc_ref[...] = jnp.zeros_like(acc_ref)

    # One fused MXU matmul for both inputs; contract dim 1 of x with dim 1 of W
    # (i.e. x @ W^T) so no transposed copy of W is ever materialized in HBM.
    acc_ref[...] += lax.dot_general(
        x_ref[...], w_ref[...],
        dimension_numbers=(((1,), (1,)), ((), ())),
        preferred_element_type=jnp.float32,
    )

    @pl.when(k == pl.num_programs(0) - 1)
    def _epilogue():
        b_rows = out_ref.shape[0]                   # = B (static)
        f = acc_ref[...] + b_ref[...]               # bias added exactly once
        f1 = f[:b_rows, :]
        f2 = f[b_rows:, :]
        dot12 = jnp.sum(f1 * f2, axis=1, keepdims=True)
        n1 = jnp.sqrt(jnp.sum(f1 * f1, axis=1, keepdims=True))
        n2 = jnp.sqrt(jnp.sum(f2 * f2, axis=1, keepdims=True))
        # Per-norm eps clamp, matching current torch.nn.functional.cosine_similarity.
        denom = jnp.maximum(n1, EPS) * jnp.maximum(n2, EPS)
        out_ref[...] = dot12 * pl.reciprocal(denom, approx=False)


def similarity_model(x1, x2, w, b, *, tk=512):
    """x1, x2: (B, C, H, W) float32 NCHW.  w: (HIDDEN, D).  b: (HIDDEN,).

    Returns: (B,) cosine similarity between backbone features of x1 and x2.
    """
    B = x1.shape[0]
    D = x1.shape[1] * x1.shape[2] * x1.shape[3]
    hidden = w.shape[0]

    # Fuse the siamese backbone: stack both inputs into one (2B, D) operand so
    # each K step is a single matmul pass over the (dominant) weight stream.
    x = jnp.concatenate(
        [x1.reshape(B, D), x2.reshape(B, D)], axis=0
    ).astype(jnp.float32)                              # (2B, D)
    w32 = w.astype(jnp.float32)                        # (HIDDEN, D) native layout
    b2 = b.reshape(1, hidden).astype(jnp.float32)      # (1, HIDDEN)

    # Largest K tile (multiple of 128, capped at `tk`) that evenly divides D.
    tile_k = None
    for cand in (tk, 1024, 512, 256, 128):
        if cand <= D and D % cand == 0 and cand % 128 == 0:
            tile_k = cand
            break
    if tile_k is None:
        tile_k = D  # fall back to single-shot contraction (block = full dim)
    n_k = D // tile_k

    out = pl.pallas_call(
        _similarity_kernel,
        out_shape=jax.ShapeDtypeStruct((B, 1), jnp.float32),
        grid=(n_k,),
        in_specs=[
            pl.BlockSpec((2 * B, tile_k), lambda k: (0, k)),   # stacked inputs
            pl.BlockSpec((hidden, tile_k), lambda k: (0, k)),  # weight K-tile
            pl.BlockSpec((1, hidden), lambda k: (0, 0)),       # bias (resident)
        ],
        out_specs=pl.BlockSpec((B, 1), lambda k: (0, 0)),
        scratch_shapes=[pltpu.VMEM((2 * B, hidden), jnp.float32)],
        compiler_params=pltpu.CompilerParams(
            dimension_semantics=("arbitrary",),  # K is a reduction axis
        ),
    )(x, w32, b2)

    return out.reshape(B)


def _reference(x1, x2, w, b):
    B = x1.shape[0]
    D = x1.shape[1] * x1.shape[2] * x1.shape[3]
    f1 = x1.reshape(B, D) @ w.T + b
    f2 = x2.reshape(B, D) @ w.T + b
    dot = jnp.sum(f1 * f2, axis=1)
    n1 = jnp.sqrt(jnp.sum(f1 * f1, axis=1))
    n2 = jnp.sqrt(jnp.sum(f2 * f2, axis=1))
    return dot / (jnp.maximum(n1, EPS) * jnp.maximum(n2, EPS))


if __name__ == "__main__":
    key = jax.random.PRNGKey(0)
    k1, k2, kw, kb = jax.random.split(key, 4)

    B, C, H, W = 2, 4, 16, 16
    HIDDEN = 32
    D = C * H * W

    x1 = jax.random.normal(k1, (B, C, H, W), dtype=jnp.float32)
    x2 = jax.random.normal(k2, (B, C, H, W), dtype=jnp.float32)
    # Deterministic synthetic backbone parameters (Linear(D -> HIDDEN)).
    w = jax.random.normal(kw, (HIDDEN, D), dtype=jnp.float32) * (1.0 / jnp.sqrt(D))
    b = jax.random.normal(kb, (HIDDEN,), dtype=jnp.float32) * 0.01

    sim = similarity_model(x1, x2, w, b)
    jax.block_until_ready(sim)

    ref = _reference(x1, x2, w, b)
    assert sim.shape == (B,)
    assert jnp.allclose(sim, ref, atol=1e-5, rtol=1e-5), (sim, ref)

    print("KERNEL_OK")
</pallas_src>

<mosaic_0001>
module attributes {stable_mosaic.version = 11 : i64} {
  func.func @_similarity_kernel(%arg0: i32, %arg1: memref<4x512xf32, #tpu.memory_space<vmem>>, %arg2: memref<32x512xf32, #tpu.memory_space<vmem>>, %arg3: memref<1x32xf32, #tpu.memory_space<vmem>>, %arg4: memref<2x1xf32, #tpu.memory_space<vmem>>, %arg5: memref<4x32xf32, #tpu.memory_space<vmem>>) attributes {dimension_semantics = [#tpu.dimension_semantics<arbitrary>], iteration_bounds = array<i64: 2>, scalar_prefetch = 0 : i64, scratch_operands = 1 : i64, tpu.core_type = #tpu.core_type<tc>, window_params = [{transform_indices = @transform_0, window_bounds = array<i64: 4, 512>}, {transform_indices = @transform_1, window_bounds = array<i64: 32, 512>}, {pipeline_mode = #tpu.pipeline_mode<synchronous>, transform_indices = @transform_2, window_bounds = array<i64: 1, 32>}, {pipeline_mode = #tpu.pipeline_mode<synchronous>, transform_indices = @transform_3, window_bounds = array<i64: 2, 1>}]} {
    %c0_i32 = arith.constant 0 : i32
    %0 = arith.cmpi eq, %arg0, %c0_i32 : i32
    %1 = arith.extui %0 : i1 to i32
    %c0_i32_0 = arith.constant 0 : i32
    %2 = arith.cmpi ne, %1, %c0_i32_0 : i32
    scf.if %2 {
      %cst_9 = arith.constant 0.000000e+00 : f32
      %12 = vector.broadcast %cst_9 : f32 to vector<4x32xf32>
      %c0_10 = arith.constant 0 : index
      %c0_11 = arith.constant 0 : index
      %13 = vector.load %arg5[%c0_10, %c0_11] : memref<4x32xf32, #tpu.memory_space<vmem>>, vector<4x32xf32>
      tpu.vector_store %arg5[%c0_10, %c0_11], %12 {strides = array<i32>} : memref<4x32xf32, #tpu.memory_space<vmem>>, vector<4x32xf32>,
    } else {
    }
    %c0 = arith.constant 0 : index
    %c0_1 = arith.constant 0 : index
    %3 = vector.load %arg5[%c0, %c0_1] : memref<4x32xf32, #tpu.memory_space<vmem>>, vector<4x32xf32>
    %c0_2 = arith.constant 0 : index
    %c0_3 = arith.constant 0 : index
    %4 = vector.load %arg1[%c0_2, %c0_3] : memref<4x512xf32, #tpu.memory_space<vmem>>, vector<4x512xf32>
    %c0_4 = arith.constant 0 : index
    %c0_5 = arith.constant 0 : index
    %5 = vector.load %arg2[%c0_4, %c0_5] : memref<32x512xf32, #tpu.memory_space<vmem>>, vector<32x512xf32>
    %cst = arith.constant dense<0.000000e+00> : vector<4x32xf32>
    %6 = tpu.matmul %4, %5, %cst {dimension_numbers = #tpu.dot_dimension_numbers<[1], [1], [0], [0], [0, 0, 1, 0], [], []>} : vector<4x512xf32>, vector<32x512xf32>, vector<4x32xf32> -> vector<4x32xf32>
    %7 = arith.addf %3, %6 : vector<4x32xf32>
    %c0_6 = arith.constant 0 : index
    %c0_7 = arith.constant 0 : index
    %8 = vector.load %arg5[%c0_6, %c0_7] : memref<4x32xf32, #tpu.memory_space<vmem>>, vector<4x32xf32>
    tpu.vector_store %arg5[%c0_6, %c0_7], %7 {strides = array<i32>} : memref<4x32xf32, #tpu.memory_space<vmem>>, vector<4x32xf32>,
    %c1_i32 = arith.constant 1 : i32
    %9 = arith.cmpi eq, %arg0, %c1_i32 : i32
    %10 = arith.extui %9 : i1 to i32
    %c0_i32_8 = arith.constant 0 : i32
    %11 = arith.cmpi ne, %10, %c0_i32_8 : i32
    scf.if %11 {
      %c0_9 = arith.constant 0 : index
      %c0_10 = arith.constant 0 : index
      %12 = vector.load %arg5[%c0_9, %c0_10] : memref<4x32xf32, #tpu.memory_space<vmem>>, vector<4x32xf32>
      %c0_11 = arith.constant 0 : index
      %c0_12 = arith.constant 0 : index
      %13 = vector.load %arg3[%c0_11, %c0_12] : memref<1x32xf32, #tpu.memory_space<vmem>>, vector<1x32xf32>
      %14 = vector.broadcast %13 : vector<1x32xf32> to vector<4x32xf32>
      %15 = arith.addf %12, %14 : vector<4x32xf32>
      %16 = vector.extract_strided_slice %15 {offsets = [0, 0], sizes = [2, 32], strides = [1, 1]} : vector<4x32xf32> to vector<2x32xf32>
      %17 = vector.extract_strided_slice %15 {offsets = [2, 0], sizes = [2, 32], strides = [1, 1]} : vector<4x32xf32> to vector<2x32xf32>
      %18 = arith.mulf %16, %17 : vector<2x32xf32>
      %cst_13 = arith.constant dense<0.000000e+00> : vector<2xf32>
      %19 = vector.multi_reduction <add>, %18, %cst_13 [1] : vector<2x32xf32> to vector<2xf32>
      %20 = vector.shape_cast %19 : vector<2xf32> to vector<2x1xf32>
      %21 = arith.mulf %16, %16 : vector<2x32xf32>
      %cst_14 = arith.constant dense<0.000000e+00> : vector<2xf32>
      %22 = vector.multi_reduction <add>, %21, %cst_14 [1] : vector<2x32xf32> to vector<2xf32>
      %23 = vector.shape_cast %22 : vector<2xf32> to vector<2x1xf32>
      %24 = math.sqrt %23 : vector<2x1xf32>
      %25 = arith.mulf %17, %17 : vector<2x32xf32>
      %cst_15 = arith.constant dense<0.000000e+00> : vector<2xf32>
      %26 = vector.multi_reduction <add>, %25, %cst_15 [1] : vector<2x32xf32> to vector<2xf32>
      %27 = vector.shape_cast %26 : vector<2xf32> to vector<2x1xf32>
      %28 = math.sqrt %27 : vector<2x1xf32>
      %cst_16 = arith.constant 9.99999993E-9 : f32
      %29 = vector.broadcast %cst_16 : f32 to vector<2x1xf32>
      %30 = arith.maximumf %24, %29 : vector<2x1xf32>
      %cst_17 = arith.constant 9.99999993E-9 : f32
      %31 = vector.broadcast %cst_17 : f32 to vector<2x1xf32>
      %32 = arith.maximumf %28, %31 : vector<2x1xf32>
      %33 = arith.mulf %30, %32 : vector<2x1xf32>
      %34 = tpu.reciprocal %33 : vector<2x1xf32> -> vector<2x1xf32>
      %35 = arith.mulf %20, %34 : vector<2x1xf32>
      %c0_18 = arith.constant 0 : index
      %c0_19 = arith.constant 0 : index
      %36 = vector.load %arg4[%c0_18, %c0_19] : memref<2x1xf32, #tpu.memory_space<vmem>>, vector<2x1xf32>
      tpu.vector_store %arg4[%c0_18, %c0_19], %35 {strides = array<i32>} : memref<2x1xf32, #tpu.memory_space<vmem>>, vector<2x1xf32>,
    } else {
    }
    return
  }
  func.func @transform_0(%arg0: i32) -> (i32, i32) {
    %c0_i32 = arith.constant 0 : i32
    %c0_i32_0 = arith.constant 0 : i32
    return %c0_i32, %arg0 : i32, i32
  }
  func.func @transform_1(%arg0: i32) -> (i32, i32) {
    %c0_i32 = arith.constant 0 : i32
    %c0_i32_0 = arith.constant 0 : i32
    return %c0_i32, %arg0 : i32, i32
  }
  func.func @transform_2(%arg0: i32) -> (i32, i32) {
    %c0_i32 = arith.constant 0 : i32
    %c0_i32_0 = arith.constant 0 : i32
    %c0_i32_1 = arith.constant 0 : i32
    return %c0_i32, %c0_i32_0 : i32, i32
  }
  func.func @transform_3(%arg0: i32) -> (i32, i32) {
    %c0_i32 = arith.constant 0 : i32
    %c0_i32_0 = arith.constant 0 : i32
    %c0_i32_1 = arith.constant 0 : i32
    return %c0_i32, %c0_i32_0 : i32, i32
  }
}

</mosaic_0001>

<llo_original>
// kernel: tpu_custom_call.1
$region0: #{tpu_custom_call.1}
  #allocation0 [shape = 'u32[]', space=smem, size = 0x4, offset = 0x4, fixed_abs, tag = 'smem constant byte address 0x4 - core index']
  #allocation1 [shape = 'u32[144,128]{1,0:T(1,128)}', space=vmem, size = 0x12000, scoped, tag = 'internal scratch']
  #allocation2 [shape = 'f32[4,32]{1,0:T(4,128)}', space=vmem, size = 0x800, scoped, tag = 'scratch operand']
  %s0 = inlined_call_operand.hbm [shape: f32[4,1024], index: 0, kind: input, shape index: {}]
  %s1 = inlined_call_operand.hbm [shape: f32[32,1024], index: 1, kind: input, shape index: {}]
  %s2 = inlined_call_operand.vmem [shape: f32[1,32], index: 2, kind: input, shape index: {}]
  %s3 = inlined_call_operand.vmem [shape: f32[2,1], index: 3, kind: output, shape index: {}]
  %s4 = sld [smem:[#allocation0]]
  $region61: #{tpu_custom_call.1} parent=0
    _
  %s6 = ssub.s32 1, %s4
  %s7 = scalar_select 0, %s6, %s4
  $region1: #{tpu_custom_call.1} parent=0
    #allocation3 [shape = 'u8[16384]{0}', space=vmem, size = 0x4000, scoped, tag = 'input window, operand 0']
    #allocation4 [shape = 's32[2]{0}', space=sflag, size = 0x8, scoped, tag = 'scoped memory for tpu_custom_call.1']
    #allocation5 [shape = 'u8[131072]{0}', space=vmem, size = 0x20000, scoped, tag = 'input window, operand 1']
    #allocation6 [shape = 's32[2]{0}', space=sflag, size = 0x8, scoped, tag = 'scoped memory for tpu_custom_call.1']
    %8 = vsyncpa [#allocation4], 0
    %s9 = scalar_lea.sflag [#allocation4], 1
    %10 = vsyncpa %s9, 0
    %11 = vsyncpa [#allocation6], 0
    %s12 = scalar_lea.sflag [#allocation6], 1
    %13 = vsyncpa %s12, 0
    loop: start=0, step=1, limit=4
    $region2: #{tpu_custom_call.1} parent=1 // loop_pre_header
      _
    $region3: #{tpu_custom_call.1} parent=1 // loop_header
      %s15 = sphi 0, %s19
      %p16 = scmp.ge.s32.totalorder %s15, 4
      %s25 = sphi 0, %s27
      %s28 = sphi 0, %s25
      %s29 = sphi 0, %s28
      %s45 = sphi 0, %s29
      %s51 = sphi 0, %s53
      %s54 = sphi 0, %s51
      %s55 = sphi 0, %s54
      %s71 = sphi 0, %s55
      %s75 = sphi 0, %s75
      %s77 = sphi 0, %s75
      %s78 = sphi 0, %s77
      %s92 = sphi 0, %s78
      %s96 = sphi 0, %s96
      %s98 = sphi 0, %s96
      %s99 = sphi 0, %s98
      %s113 = sphi 0, %s99
    $region4: #{tpu_custom_call.1} parent=1 // loop_header_branch
      %18 = sbr.rel (%p16) target = $region8
    $region5: #{tpu_custom_call.1} parent=1 // loop_body
      %s20 = ssub.s32 %s15, 1
      %s21 = ssub.s32 %s15, 2
      %s22 = sadd.s32 %s15, 1
      %s23 = ssub.s32 %s15, %s22
      %p24 = scmp.eq.s32.totalorder %s23, 0
      %s26 = sadd.s32 %s25, 1
      %s27 = scalar_select %p24, %s25, %s26
      %p30 = pneg %p24
      %p31 = scmp.eq.s32.totalorder %s15, 1
      %p32 = por %p30, %p31
      %p33 = scmp.ne.s32.totalorder %s25, %s28
      %p34 = scmp.eq.s32.totalorder %s15, 0
      %p35 = por %p33, %p34
      %p36 = scmp.ne.s32.totalorder %s25, %s28
      %p37 = scmp.eq.s32.totalorder %s20, 1
      %p38 = por %p36, %p37
      %p39 = scmp.ne.s32.totalorder %s28, %s29
      %p40 = scmp.eq.s32.totalorder %s20, 0
      %p41 = por %p39, %p40
      %p42 = scmp.ne.s32.totalorder %s28, %s29
      %p43 = scmp.eq.s32.totalorder %s21, 1
      %p44 = por %p42, %p43
      %p46 = scmp.ne.s32.totalorder %s29, %s45
      %p47 = scmp.eq.s32.totalorder %s21, 0
      %p48 = por %p46, %p47
      %s49 = ssub.s32 %s15, %s22
      %p50 = scmp.eq.s32.totalorder %s49, 0
      %s52 = sadd.s32 %s51, 1
      %s53 = scalar_select %p50, %s51, %s52
      %p56 = pneg %p50
      %p57 = scmp.eq.s32.totalorder %s15, 1
      %p58 = por %p56, %p57
      %p59 = scmp.ne.s32.totalorder %s51, %s54
      %p60 = scmp.eq.s32.totalorder %s15, 0
      %p61 = por %p59, %p60
      %p62 = scmp.ne.s32.totalorder %s51, %s54
      %p63 = scmp.eq.s32.totalorder %s20, 1
      %p64 = por %p62, %p63
      %p65 = scmp.ne.s32.totalorder %s54, %s55
      %p66 = scmp.eq.s32.totalorder %s20, 0
      %p67 = por %p65, %p66
      %p68 = scmp.ne.s32.totalorder %s54, %s55
      %p69 = scmp.eq.s32.totalorder %s21, 1
      %p70 = por %p68, %p69
      %p72 = scmp.ne.s32.totalorder %s55, %s71
      %p73 = scmp.eq.s32.totalorder %s21, 0
      %p74 = por %p72, %p73
      %s76 = sadd.s32 %s75, 1
      %p79 = scmp.eq.s32.totalorder %s15, 1
      %p80 = scmp.ne.s32.totalorder %s75, %s77
      %p81 = scmp.eq.s32.totalorder %s15, 0
      %p82 = por %p80, %p81
      %p83 = scmp.ne.s32.totalorder %s75, %s77
      %p84 = scmp.eq.s32.totalorder %s20, 1
      %p85 = por %p83, %p84
      %p86 = scmp.ne.s32.totalorder %s77, %s78
      %p87 = scmp.eq.s32.totalorder %s20, 0
      %p88 = por %p86, %p87
      %p89 = scmp.ne.s32.totalorder %s77, %s78
      %p90 = scmp.eq.s32.totalorder %s21, 1
      %p91 = por %p89, %p90
      %p93 = scmp.ne.s32.totalorder %s78, %s92
      %p94 = scmp.eq.s32.totalorder %s21, 0
      %p95 = por %p93, %p94
      %s97 = sadd.s32 %s96, 1
      %p100 = scmp.eq.s32.totalorder %s15, 1
      %p101 = scmp.ne.s32.totalorder %s96, %s98
      %p102 = scmp.eq.s32.totalorder %s15, 0
      %p103 = por %p101, %p102
      %p104 = scmp.ne.s32.totalorder %s96, %s98
      %p105 = scmp.eq.s32.totalorder %s20, 1
      %p106 = por %p104, %p105
      %p107 = scmp.ne.s32.totalorder %s98, %s99
      %p108 = scmp.eq.s32.totalorder %s20, 0
      %p109 = por %p107, %p108
      %p110 = scmp.ne.s32.totalorder %s98, %s99
      %p111 = scmp.eq.s32.totalorder %s21, 1
      %p112 = por %p110, %p111
      %p114 = scmp.ne.s32.totalorder %s99, %s113
      %p115 = scmp.eq.s32.totalorder %s21, 0
      %p116 = por %p114, %p115
      %p117 = scmp.le.s32.totalorder 1, %s15
      %p118 = scmp.lt.s32.totalorder %s15, 3
      %p119 = pnand %p117, %p118
      %p120 = pneg %p119
      // Predicated region
      $region9: #{tpu_custom_call.1} parent=5 // pred_check
        _
      $region10: #{tpu_custom_call.1} parent=5 // pred_check_branch
        %122 = sbr.rel (%p119) target = $region12
      $region11: #{tpu_custom_call.1} parent=5 // pred_region
        %s123 = ssub.s32 %s15, 1
        // Predicated region
        $region13: #{tpu_custom_call.1} parent=11 // pred_check
          %p124 = pneg %p88
        $region14: #{tpu_custom_call.1} parent=11 // pred_check_branch
          %126 = sbr.rel (%p124) target = $region16
        $region15: #{tpu_custom_call.1} parent=11 // pred_region
          _
        $region16: #{tpu_custom_call.1} parent=11 // pred_fallthru
          _
      $region12: #{tpu_custom_call.1} parent=5 // pred_fallthru
        _
      %p127 = scmp.lt.s32.totalorder %s15, 2
      // Predicated region
      $region17: #{tpu_custom_call.1} parent=5 // pred_check
        %p128 = pneg %p127
      $region18: #{tpu_custom_call.1} parent=5 // pred_check_branch
        %130 = sbr.rel (%p128) target = $region20
      $region19: #{tpu_custom_call.1} parent=5 // pred_region
        // Predicated region
        $region21: #{tpu_custom_call.1} parent=19 // pred_check
          %p131 = pneg %p35
        $region22: #{tpu_custom_call.1} parent=19 // pred_check_branch
          %133 = sbr.rel (%p131) target = $region24
        $region23: #{tpu_custom_call.1} parent=19 // pred_region
          %s134 = sand.u32 %s25, 1
          %s135 = scalar_lea.sflag [#allocation4], %s134
          %s136 = sand.u32 %s25, 1
          %s137 = smul.addr %s136, 16
          %s138 = scalar_lea.vmem [#allocation3], %s137
          %s139 = smul.u32 4, %s15
          %s141 = ssub.s32 256, 256
          %142 = vsyncadd %s135, %s141
          %s143 = smul.addr %s139, 64
          %s144 = scalar_lea.hbm %s0, %s143
          %s146 = sshll.u32 %s138, 4
          %s147 = int_to_ptr.vmem [resolvable:$true] %s146
          %149 = dma.hbm_to_vmem [thread:$0]  %s144, 256, %s147, %s135
        $region24: #{tpu_custom_call.1} parent=19 // pred_fallthru
          _
        // Predicated region
        $region25: #{tpu_custom_call.1} parent=19 // pred_check
          %p150 = pneg %p61
        $region26: #{tpu_custom_call.1} parent=19 // pred_check_branch
          %152 = sbr.rel (%p150) target = $region28
        $region27: #{tpu_custom_call.1} parent=19 // pred_region
          %s153 = sand.u32 %s51, 1
          %s154 = scalar_lea.sflag [#allocation6], %s153
          %s155 = sand.u32 %s51, 1
          %s156 = smul.addr %s155, 128
          %s157 = scalar_lea.vmem [#allocation5], %s156
          %s158 = smul.u32 4, %s15
          %s160 = ssub.s32 2048, 2048
          %161 = vsyncadd %s154, %s160
          %s162 = smul.addr %s158, 128
          %s163 = scalar_lea.hbm %s1, %s162
          %s164 = sshll.u32 %s157, 4
          %s165 = int_to_ptr.vmem [resolvable:$true] %s164
          %170 = dma.hbm_to_vmem [thread:$0]  %s163, 2048, %s165, %s154, 1024, 512, 32
        $region28: #{tpu_custom_call.1} parent=19 // pred_fallthru
          _
      $region20: #{tpu_custom_call.1} parent=5 // pred_fallthru
        _
      %p171 = scmp.le.s32.totalorder 1, %s15
      %p172 = scmp.lt.s32.totalorder %s15, 3
      %p173 = pnand %p171, %p172
      %p174 = pneg %p173
      // Predicated region
      $region29: #{tpu_custom_call.1} parent=5 // pred_check
        _
      $region30: #{tpu_custom_call.1} parent=5 // pred_check_branch
        %176 = sbr.rel (%p173) target = $region32
      $region31: #{tpu_custom_call.1} parent=5 // pred_region
        %s177 = ssub.s32 %s15, 1
        %s178 = sand.u32 %s28, 1
        %s179 = scalar_lea.sflag [#allocation4], %s178
        %s180 = sand.u32 %s28, 1
        %s181 = smul.addr %s180, 16
        %s182 = scalar_lea.vmem [#allocation3], %s181
        // Predicated region
        $region33: #{tpu_custom_call.1} parent=31 // pred_check
          %p183 = pneg %p41
        $region34: #{tpu_custom_call.1} parent=31 // pred_check_branch
          %185 = sbr.rel (%p183) target = $region36
        $region35: #{tpu_custom_call.1} parent=31 // pred_region
          %186 = dma.done %s179, 256
        $region36: #{tpu_custom_call.1} parent=31 // pred_fallthru
          _
        %s187 = sand.u32 %s54, 1
        %s188 = scalar_lea.sflag [#allocation6], %s187
        %s189 = sand.u32 %s54, 1
        %s190 = smul.addr %s189, 128
        %s191 = scalar_lea.vmem [#allocation5], %s190
        // Predicated region
        $region37: #{tpu_custom_call.1} parent=31 // pred_check
          %p192 = pneg %p67
        $region38: #{tpu_custom_call.1} parent=31 // pred_check_branch
          %194 = sbr.rel (%p192) target = $region40
        $region39: #{tpu_custom_call.1} parent=31 // pred_region
          %195 = dma.done %s188, 2048
        $region40: #{tpu_custom_call.1} parent=31 // pred_fallthru
          _
        %s196 = sand.u32 %s28, 1
        %s197 = scalar_lea.sflag [#allocation4], %s196
        %s198 = sand.u32 %s28, 1
        %s199 = smul.addr %s198, 16
        %s200 = scalar_lea.vmem [#allocation3], %s199
        %p201 = pneg %p41
        %p202 = pneg %p38
        %s203 = sand.u32 %s54, 1
        %s204 = scalar_lea.sflag [#allocation6], %s203
        %s205 = sand.u32 %s54, 1
        %s206 = smul.addr %s205, 128
        %s207 = scalar_lea.vmem [#allocation5], %s206
        %p208 = pneg %p67
        %p209 = pneg %p64
        %p210 = pneg %p88
        %p211 = pneg %p85
        %p212 = pneg %p109
        %p213 = pneg %p106
        %s214 = smul.u32 4, %s20
        %s215 = smul.u32 4, %s20
        %p216 = scmp.eq.s32.totalorder %s20, 0
        // Predicated region
        $region41: #{tpu_custom_call.1} parent=31 // pred_check
          %p217 = pneg %p216
        $region42: #{tpu_custom_call.1} parent=31 // pred_check_branch
          %219 = sbr.rel (%p217) target = $region44
        $region43: #{tpu_custom_call.1} parent=31 // pred_region
          %vm220 = vcmask 257024
          %221 = vst.msk [vmem:[#allocation2] sm:$0xf] %vm220, 0.0
        $region44: #{tpu_custom_call.1} parent=31 // pred_fallthru
          _
        %v222 = vld [vmem:[#allocation2] sm:$0xf]
        %v223 = vld [vmem:[%s182] sm:$0xff]
        %v224 = vld [vmem:[%s182 + $0x8] sm:$0xff]
        %v225 = vld [vmem:[%s191] sm:$0xff]
        %v226 = vld [vmem:[%s191 + $0x8] sm:$0xff]
        %v227 = vld [vmem:[%s191 + $0x10] sm:$0xff]
        %v228 = vld [vmem:[%s191 + $0x18] sm:$0xff]
        %v229 = vld [vmem:[%s191 + $0x20] sm:$0xff]
        %v230 = vld [vmem:[%s191 + $0x28] sm:$0xff]
        %v231 = vld [vmem:[%s191 + $0x30] sm:$0xff]
        %v232 = vld [vmem:[%s191 + $0x38] sm:$0xff]
        %v233 = vld [vmem:[%s191 + $0x40] sm:$0xff]
        %v234 = vld [vmem:[%s191 + $0x48] sm:$0xff]
        %v235 = vld [vmem:[%s191 + $0x50] sm:$0xff]
        %v236 = vld [vmem:[%s191 + $0x58] sm:$0xff]
        %v237 = vld [vmem:[%s191 + $0x60] sm:$0xff]
        %v238 = vld [vmem:[%s191 + $0x68] sm:$0xff]
        %v239 = vld [vmem:[%s191 + $0x70] sm:$0xff]
        %v240 = vld [vmem:[%s191 + $0x78] sm:$0xff]
        %v243 = vcombine.high %v223, %v223
        %v244 = vcombine.high %v224, %v224
        %247 = vmatprep.subr.mxu0 %v226
        %248 = vmatpush1.xpose.msra.mxu0 %v225
        %249 = vmatprep.subr.mxu0 %v230
        %250 = vmatpush1.xpose.msra.mxu0 %v229
        %251 = vmatprep.subr.mxu0 %v234
        %252 = vmatpush1.xpose.msra.mxu0 %v233
        %253 = vmatprep.subr.mxu0 %v238
        %254 = vmatpush1.xpose.msra.mxu0 %v237
        %255 = vmatprep.subr.mxu0 0.0
        %256 = vmatpush1.xpose.msra.mxu0 0.0
        %257 = vmatprep.subr.mxu0 0.0
        %258 = vmatpush1.xpose.msra.mxu0 0.0
        %259 = vmatprep.subr.mxu0 0.0
        %260 = vmatpush1.xpose.msra.mxu0 0.0
        %261 = vmatprep.subr.mxu0 0.0
        %262 = vmatpush1.xpose.msra.mxu0 0.0
        %263 = vmatprep.subr.mxu0 0.0
        %264 = vmatpush1.xpose.msra.mxu0 0.0
        %265 = vmatprep.subr.mxu0 0.0
        %266 = vmatpush1.xpose.msra.mxu0 0.0
        %267 = vmatprep.subr.mxu0 0.0
        %268 = vmatpush1.xpose.msra.mxu0 0.0
        %269 = vmatprep.subr.mxu0 0.0
        %270 = vmatpush1.xpose.msra.mxu0 0.0
        %271 = vmatprep.subr.mxu0 0.0
        %272 = vmatpush1.xpose.msra.mxu0 0.0
        %273 = vmatprep.subr.mxu0 0.0
        %274 = vmatpush1.xpose.msra.mxu0 0.0
        %275 = vmatprep.subr.mxu0 0.0
        %276 = vmatpush1.xpose.msra.mxu0 0.0
        %277 = vmatprep.subr.mxu0 0.0
        %278 = vmatpush1.xpose.msra.mxu0 0.0
        %279 = vmatprep.subr.mxu0 0.0
        %280 = vmatpush1.xpose.msra.mxu0 0.0
        %281 = vmatprep.subr.mxu0 0.0
        %282 = vmatpush1.xpose.msra.mxu0 0.0
        %283 = vmatprep.subr.mxu0 0.0
        %284 = vmatpush1.xpose.msra.mxu0 0.0
        %285 = vmatprep.subr.mxu0 0.0
        %286 = vmatpush1.xpose.msra.mxu0 0.0
        %287 = vmatprep.subr.mxu0 0.0
        %288 = vmatpush1.xpose.msra.mxu0 0.0
        %289 = vmatprep.subr.mxu0 0.0
        %290 = vmatpush1.xpose.msra.mxu0 0.0
        %291 = vmatprep.subr.mxu0 0.0
        %292 = vmatpush1.xpose.msra.mxu0 0.0
        %293 = vmatprep.subr.mxu0 0.0
        %294 = vmatpush1.xpose.msra.mxu0 0.0
        %295 = vmatprep.subr.mxu0 0.0
        %296 = vmatpush1.xpose.msra.mxu0 0.0
        %297 = vmatprep.subr.mxu0 0.0
        %298 = vmatpush1.xpose.msra.mxu0 0.0
        %299 = vmatprep.subr.mxu0 0.0
        %300 = vmatpush1.xpose.msra.mxu0 0.0
        %301 = vmatprep.subr.mxu0 0.0
        %302 = vmatpush1.xpose.msra.mxu0 0.0
        %303 = vmatprep.subr.mxu0 0.0
        %304 = vmatpush1.xpose.msra.mxu0 0.0
        %305 = vmatprep.subr.mxu0 0.0
        %306 = vmatpush1.xpose.msra.mxu0 0.0
        %307 = vmatprep.subr.mxu0 0.0
        %308 = vmatpush1.xpose.msra.mxu0 0.0
        %309 = vmatprep.subr.mxu0 0.0
        %310 = vmatpush1.xpose.msra.mxu0 0.0
        %311 = vmatprep.mubr.f32.mxu0 %v243
        %312 = vmatmul.mubr.f32.gmra.mrb[0].mxu0 %v223
        %v313 = vpop.f32.mrb[0].mxu0
        %v314 = vadd.f32 0.0, %v313
        %v315 = vpop.f32.mrb[0].mxu0
        %316 = vdwg.mxu0
        %317 = vmatprep.subr.mxu0 %v228
        %318 = vmatpush1.xpose.msra.mxu0 %v227
        %319 = vmatprep.subr.mxu0 %v232
        %320 = vmatpush1.xpose.msra.mxu0 %v231
        %321 = vmatprep.subr.mxu0 %v236
        %322 = vmatpush1.xpose.msra.mxu0 %v235
        %323 = vmatprep.subr.mxu0 %v240
        %324 = vmatpush1.xpose.msra.mxu0 %v239
        %325 = vmatprep.subr.mxu0 0.0
        %326 = vmatpush1.xpose.msra.mxu0 0.0
        %327 = vmatprep.subr.mxu0 0.0
        %328 = vmatpush1.xpose.msra.mxu0 0.0
        %329 = vmatprep.subr.mxu0 0.0
        %330 = vmatpush1.xpose.msra.mxu0 0.0
        %331 = vmatprep.subr.mxu0 0.0
        %332 = vmatpush1.xpose.msra.mxu0 0.0
        %333 = vmatprep.subr.mxu0 0.0
        %334 = vmatpush1.xpose.msra.mxu0 0.0
        %335 = vmatprep.subr.mxu0 0.0
        %336 = vmatpush1.xpose.msra.mxu0 0.0
        %337 = vmatprep.subr.mxu0 0.0
        %338 = vmatpush1.xpose.msra.mxu0 0.0
        %339 = vmatprep.subr.mxu0 0.0
        %340 = vmatpush1.xpose.msra.mxu0 0.0
        %341 = vmatprep.subr.mxu0 0.0
        %342 = vmatpush1.xpose.msra.mxu0 0.0
        %343 = vmatprep.subr.mxu0 0.0
        %344 = vmatpush1.xpose.msra.mxu0 0.0
        %345 = vmatprep.subr.mxu0 0.0
        %346 = vmatpush1.xpose.msra.mxu0 0.0
        %347 = vmatprep.subr.mxu0 0.0
        %348 = vmatpush1.xpose.msra.mxu0 0.0
        %349 = vmatprep.subr.mxu0 0.0
        %350 = vmatpush1.xpose.msra.mxu0 0.0
        %351 = vmatprep.subr.mxu0 0.0
        %352 = vmatpush1.xpose.msra.mxu0 0.0
        %353 = vmatprep.subr.mxu0 0.0
        %354 = vmatpush1.xpose.msra.mxu0 0.0
        %355 = vmatprep.subr.mxu0 0.0
        %356 = vmatpush1.xpose.msra.mxu0 0.0
        %357 = vmatprep.subr.mxu0 0.0
        %358 = vmatpush1.xpose.msra.mxu0 0.0
        %359 = vmatprep.subr.mxu0 0.0
        %360 = vmatpush1.xpose.msra.mxu0 0.0
        %361 = vmatprep.subr.mxu0 0.0
        %362 = vmatpush1.xpose.msra.mxu0 0.0
        %363 = vmatprep.subr.mxu0 0.0
        %364 = vmatpush1.xpose.msra.mxu0 0.0
        %365 = vmatprep.subr.mxu0 0.0
        %366 = vmatpush1.xpose.msra.mxu0 0.0
        %367 = vmatprep.subr.mxu0 0.0
        %368 = vmatpush1.xpose.msra.mxu0 0.0
        %369 = vmatprep.subr.mxu0 0.0
        %370 = vmatpush1.xpose.msra.mxu0 0.0
        %371 = vmatprep.subr.mxu0 0.0
        %372 = vmatpush1.xpose.msra.mxu0 0.0
        %373 = vmatprep.subr.mxu0 0.0
        %374 = vmatpush1.xpose.msra.mxu0 0.0
        %375 = vmatprep.subr.mxu0 0.0
        %376 = vmatpush1.xpose.msra.mxu0 0.0
        %377 = vmatprep.subr.mxu0 0.0
        %378 = vmatpush1.xpose.msra.mxu0 0.0
        %379 = vmatprep.subr.mxu0 0.0
        %380 = vmatpush1.xpose.msra.mxu0 0.0
        %381 = vmatprep.mubr.f32.mxu0 %v244
        %382 = vmatmul.mubr.f32.gmra.mrb[0].mxu0 %v224
        %v383 = vpop.f32.mrb[0].mxu0
        %v384 = vadd.f32 %v314, %v383
        %v385 = vpop.f32.mrb[0].mxu0
        %386 = vdwg.mxu0
        %v387 = vadd.f32 %v222, %v384
        %vm388 = vcmask 257024
        %389 = vst.msk [vmem:[#allocation2] sm:$0xf] %vm388, %v387
        %p390 = scmp.eq.s32.totalorder %s20, 1
        // Predicated region
        $region45: #{tpu_custom_call.1} parent=31 // pred_check
          %p391 = pneg %p390
        $region46: #{tpu_custom_call.1} parent=31 // pred_check_branch
          %393 = sbr.rel (%p391) target = $region48
        $region47: #{tpu_custom_call.1} parent=31 // pred_region
          %v394 = vld [vmem:[#allocation2] sm:$0xf]
          %v395 = vld [vmem:[%s2] sm:$0x1]
          %v397 = vlaneseq
          %v398 = vshrl.u32 %v397, 7
          %v399 = vsub.s32 0, %v398
          %v400 = vrot.slane %v395, %v399
          %v402 = vadd.f32 %v394, %v400
          %v404 = vrot.slane %v402, 2
          %v406 = vmul.f32 %v402, %v404
          %vm407 = vcmask 254976
          %v408 = vsel %vm407, %v406, 0.0
          %409 = vadd.xlane.f32.xlu0 %v408
          %v410 = vpop.xlane.xlu0 %409
          %v411 = vmul.f32 %v402, %v402
          %v412 = vsel %vm407, %v411, 0.0
          %413 = vadd.xlane.f32.xlu0 %v412
          %v414 = vpop.xlane.xlu0 %413
          %v415 = vrsqrt.pop %v414
          %v416 = vmul.f32 %v414, %v415
          %vm417 = vcmp.eq.f32.partialorder %v414, inf
          %v418 = vsel %vm417, %v414, %v416
          %vm419 = vcmp.eq.f32.partialorder %v414, 0.0
          %v420 = vand.u32 %v414, 2147483648
          %v421 = vsel %vm419, %v420, %v418
          %vm422 = vcmask 257026
          %v423 = vsel %vm422, %v411, 0.0
          %424 = vadd.xlane.f32.xlu0 %v423
          %v425 = vpop.xlane.xlu0 %424
          %v426 = vrsqrt.pop %v425
          %v427 = vmul.f32 %v425, %v426
          %vm428 = vcmp.eq.f32.partialorder %v425, inf
          %v429 = vsel %vm428, %v425, %v427
          %vm430 = vcmp.eq.f32.partialorder %v425, 0.0
          %v431 = vand.u32 %v425, 2147483648
          %v432 = vsel %vm430, %v431, %v429
          %v433 = vmax.f32 %v421, 1e-08
          %v434 = vmax.f32 %v432, 1e-08
          %v436 = vrot.slane %v434, 2
          %v438 = vmul.f32 %v433, %v436
          %v439 = vrcp.pop %v438
          %v440 = vmul.f32 %v410, %v439
          %vm441 = vcmask 1024
          %442 = vst.msk [vmem:[%s3] sm:$0x3] %vm441, %v440
        $region48: #{tpu_custom_call.1} parent=31 // pred_fallthru
          _
        // Predicated region
        $region49: #{tpu_custom_call.1} parent=31 // pred_check
          %p443 = pneg %p106
        $region50: #{tpu_custom_call.1} parent=31 // pred_check_branch
          %445 = sbr.rel (%p443) target = $region52
        $region51: #{tpu_custom_call.1} parent=31 // pred_region
          _
        $region52: #{tpu_custom_call.1} parent=31 // pred_fallthru
          _
        // Predicated region
        $region53: #{tpu_custom_call.1} parent=31 // pred_check
          %p446 = pneg %p106
        $region54: #{tpu_custom_call.1} parent=31 // pred_check_branch
          %448 = sbr.rel (%p446) target = $region56
        $region55: #{tpu_custom_call.1} parent=31 // pred_region
          _
        $region56: #{tpu_custom_call.1} parent=31 // pred_fallthru
          _
      $region32: #{tpu_custom_call.1} parent=5 // pred_fallthru
        _
      %p449 = scmp.le.s32.totalorder 2, %s15
      // Predicated region
      $region57: #{tpu_custom_call.1} parent=5 // pred_check
        %p450 = pneg %p449
      $region58: #{tpu_custom_call.1} parent=5 // pred_check_branch
        %452 = sbr.rel (%p450) target = $region60
      $region59: #{tpu_custom_call.1} parent=5 // pred_region
        %s453 = ssub.s32 %s15, 2
      $region60: #{tpu_custom_call.1} parent=5 // pred_fallthru
        _
    $region6: #{tpu_custom_call.1} parent=1 // loop_footer
      %s19 = sadd.s32 1, %s15
    $region7: #{tpu_custom_call.1} parent=1 // loop_footer_branch
      %14 = sbr.rel target = $region3
    $region8: #{tpu_custom_call.1} parent=1 // loop_exit
      _
    %454 = vsyncpa [#allocation4], 1
    %s455 = scalar_lea.sflag [#allocation4], 1
    %456 = vsyncpa %s455, 1
    %457 = vsyncpa [#allocation6], 1
    %s458 = scalar_lea.sflag [#allocation6], 1
    %459 = vsyncpa %s458, 1

</llo_original>
